<compile_context>
chip_gen: v6e
topology: v6e:2x2x1
jax: 0.10.0
libtpu: 0.0.40
codegen_flags: <defaults>
</compile_context>

<pallas_src>
import functools

import jax
import jax.numpy as jnp
import numpy as np
from jax import lax
from jax.experimental import pallas as pl
from jax.experimental.pallas import tpu as pltpu

# Problem sizes (small, consistent with the module: in_channels == out_channels).
N, C, L = 2, 8, 64       # batch, channels, sequence length  -> packed slab is (8, 128)
K = 3                    # kernel_size
DIL = 2                  # dilation of conv1 (padding = DIL)
EPS = 1e-5


def _tap_stack(a, lp, dilation, seg_len):
    """Build the (K*C, N*L) stack of shifted tap windows of `a`.

    Tap k reads a[:, t + (k-1)*dilation]; positions outside the current batch
    segment (length seg_len) are zeroed, which implements the conv's zero padding
    and prevents leakage across the packed batch boundary.
    """
    nl = a.shape[-1]
    taps = []
    for k in range(K):
        o = (k - 1) * dilation
        if o == 0:
            taps.append(a)
            continue
        # shifted[:, t] = a[:, (t + o) % nl]   (circular lane roll on the XLU)
        shifted = pltpu.roll(a, (-o) % nl, axis=1)
        # keep only in-segment source positions: 0 <= lp + o < seg_len
        valid = jnp.logical_and(lp + o >= 0, lp + o < seg_len)      # (1, nl) bool
        taps.append(jnp.where(valid, shifted, 0.0))
    return jnp.concatenate(taps, axis=0)                            # (K*C, nl)


def residual_block_kernel(x_ref, w_ref, bn_ref, o_ref, *, seg_len, dilation):
    x = x_ref[...]                       # (C, N*L) f32, batches packed along lanes
    bn = bn_ref[...]                     # (C, 3)  f32: [scale1 | shift1 | shift2]
    s1 = bn[:, 0:1]
    b1 = bn[:, 1:2]
    b2 = bn[:, 2:3]

    nl = x.shape[-1]
    # Position of each packed column inside its length-`seg_len` batch segment, generated
    # in-kernel (no DMA'd index operand); seg_len is a power of two so this is a bitwise AND.
    lp = lax.broadcasted_iota(jnp.int32, (1, nl), 1) & (seg_len - 1)

    # --- BN1 (folded scale/shift) + ReLU, then conv1 (dil, pad=dil) as one MXU matmul ---------
    a = jnp.maximum(x * s1 + b1, 0.0)
    x1 = jnp.dot(w_ref[0], _tap_stack(a, lp, dilation, seg_len),
                 preferred_element_type=jnp.float32)                # (C, N*L) f32

    # --- BN2 + ReLU, then conv2 (dil=1, pad=1): BN2's scale is pre-folded into w_ref[0] -------
    b = jnp.maximum(x1 + b2, 0.0)
    x2 = jnp.dot(w_ref[1], _tap_stack(b, lp, 1, seg_len),
                 preferred_element_type=jnp.float32)                # (C, N*L) f32

    # --- residual add (self.skip is an empty Sequential == identity); lane-dense full store ---
    o_ref[...] = x2 + x


def _prepare_params(w1, w2, scale1, shift1, scale2, shift2):
    """Pack conv weights + BN params into 2 arrays (host-side, done once per block)."""
    c = w1.shape[0]
    # (Cout, Cin, K) -> (Cout, K*Cin); tap k occupies columns [k*Cin, (k+1)*Cin), matching
    # the kernel's tap-stack ordering.
    w1_cat = jnp.transpose(w1, (0, 2, 1)).reshape(c, K * c)
    w2_cat = jnp.transpose(w2, (0, 2, 1)).reshape(c, K * c)
    # Fold BN2 scale into conv1 rows: relu(s2*(W1@taps)+b2) == relu(((s2[:,None]*W1)@taps)+b2).
    w_stack = jnp.stack([scale2[:, None] * w1_cat, w2_cat], axis=0).astype(jnp.float32)  # (2,C,K*C)
    bn = jnp.stack([scale1, shift1, shift2], axis=1).astype(jnp.float32)                 # (C, 3)
    return w_stack, bn


def residual_block_packed(x_p, w_stack, bn, *, seg_len, dilation):
    """One grid-less pallas_call over the lane-dense (C, N*L) slab; 3 operands total."""
    c, nl = x_p.shape
    vmem = pl.BlockSpec(memory_space=pltpu.MemorySpace.VMEM)
    return pl.pallas_call(
        functools.partial(residual_block_kernel, seg_len=seg_len, dilation=dilation),
        out_shape=jax.ShapeDtypeStruct((c, nl), jnp.float32),
        in_specs=[vmem, vmem, vmem],
        out_specs=vmem,
        compiler_params=pltpu.CompilerParams(vmem_limit_bytes=32 * 1024 * 1024),
    )(x_p, w_stack, bn)


def residual_block(x, w1, w2, scale1, shift1, scale2, shift2):
    """x: (N, C, L) f32; w1, w2: (Cout, Cin, K) f32 (PyTorch Conv1d OIH layout).

    In a full ProtCNN stack, keep activations in the packed (C, N*L) layout and call
    residual_block_packed() per block; the pack/unpack below is paid once at model entry/exit.
    """
    n, c, l = x.shape
    assert l & (l - 1) == 0, "segment length must be a power of two for the in-kernel mask"
    # Lane-dense repack: (N, C, L) -> (C, N*L); one kernel invocation, no grid.
    x_p = jnp.transpose(x, (1, 0, 2)).reshape(c, n * l).astype(jnp.float32)
    w_stack, bn = _prepare_params(w1, w2, scale1, shift1, scale2, shift2)
    y_p = residual_block_packed(x_p, w_stack, bn, seg_len=l, dilation=DIL)
    # Undo the repack: (C, N*L) -> (N, C, L).
    return y_p.reshape(c, n, l).transpose(1, 0, 2)


def reference(x, w1, w2, g1, be1, m1, v1, g2, be2, m2, v2):
    """Pure-JAX reference matching the PyTorch forward (eval-mode BN)."""
    def bn(y, g, b, m, v):
        inv = g / jnp.sqrt(v + EPS)
        return y * inv[None, :, None] + (b - m * inv)[None, :, None]

    a = jax.nn.relu(bn(x, g1, be1, m1, v1))
    x1 = jax.lax.conv_general_dilated(
        a, w1, window_strides=(1,), padding=[(DIL, DIL)], rhs_dilation=(DIL,),
        dimension_numbers=("NCH", "OIH", "NCH"))
    bb = jax.nn.relu(bn(x1, g2, be2, m2, v2))
    x2 = jax.lax.conv_general_dilated(
        bb, w2, window_strides=(1,), padding=[(1, 1)],
        dimension_numbers=("NCH", "OIH", "NCH"))
    return x2 + x


if __name__ == "__main__":
    key = jax.random.PRNGKey(0)
    ks = jax.random.split(key, 11)

    x = jax.random.normal(ks[0], (N, C, L), jnp.float32)
    # Conv weights (bias=False in the module), PyTorch layout (out, in, K).
    w1 = 0.1 * jax.random.normal(ks[1], (C, C, K), jnp.float32)
    w2 = 0.1 * jax.random.normal(ks[2], (C, C, K), jnp.float32)
    # BatchNorm parameters + running statistics (deterministic, non-trivial).
    g1 = 1.0 + 0.1 * jax.random.normal(ks[3], (C,), jnp.float32)
    be1 = 0.1 * jax.random.normal(ks[4], (C,), jnp.float32)
    m1 = 0.1 * jax.random.normal(ks[5], (C,), jnp.float32)
    v1 = 1.0 + 0.1 * jax.random.uniform(ks[6], (C,), jnp.float32)
    g2 = 1.0 + 0.1 * jax.random.normal(ks[7], (C,), jnp.float32)
    be2 = 0.1 * jax.random.normal(ks[8], (C,), jnp.float32)
    m2 = 0.1 * jax.random.normal(ks[9], (C,), jnp.float32)
    v2 = 1.0 + 0.1 * jax.random.uniform(ks[10], (C,), jnp.float32)

    # Fold BN (inference mode) into per-channel scale/shift for the kernel.
    scale1 = g1 / jnp.sqrt(v1 + EPS)
    shift1 = be1 - m1 * scale1
    scale2 = g2 / jnp.sqrt(v2 + EPS)
    shift2 = be2 - m2 * scale2

    out = jax.block_until_ready(residual_block(x, w1, w2, scale1, shift1, scale2, shift2))
    ref = jax.block_until_ready(reference(x, w1, w2, g1, be1, m1, v1, g2, be2, m2, v2))

    # Everything is f32 now (no bf16 casts), so a tight-ish tolerance is safe.
    np.testing.assert_allclose(np.asarray(out), np.asarray(ref), rtol=1e-2, atol=1e-2)

    print("KERNEL_OK")
</pallas_src>

<mosaic_0001>
module attributes {stable_mosaic.version = 11 : i64} {
  func.func @residual_block_kernel(%arg0: memref<8x128xf32, #tpu.memory_space<vmem>>, %arg1: memref<2x8x24xf32, #tpu.memory_space<vmem>>, %arg2: memref<8x3xf32, #tpu.memory_space<vmem>>, %arg3: memref<8x128xf32, #tpu.memory_space<vmem>>) attributes {dimension_semantics = [], scalar_prefetch = 0 : i64, scratch_operands = 0 : i64, tpu.core_type = #tpu.core_type<tc>} {
    %c0 = arith.constant 0 : index
    %c0_0 = arith.constant 0 : index
    %0 = vector.load %arg0[%c0, %c0_0] : memref<8x128xf32, #tpu.memory_space<vmem>>, vector<8x128xf32>
    %c0_1 = arith.constant 0 : index
    %c0_2 = arith.constant 0 : index
    %1 = vector.load %arg2[%c0_1, %c0_2] : memref<8x3xf32, #tpu.memory_space<vmem>>, vector<8x3xf32>
    %2 = vector.extract_strided_slice %1 {offsets = [0, 0], sizes = [8, 1], strides = [1, 1]} : vector<8x3xf32> to vector<8x1xf32>
    %3 = vector.extract_strided_slice %1 {offsets = [0, 1], sizes = [8, 1], strides = [1, 1]} : vector<8x3xf32> to vector<8x1xf32>
    %4 = vector.extract_strided_slice %1 {offsets = [0, 2], sizes = [8, 1], strides = [1, 1]} : vector<8x3xf32> to vector<8x1xf32>
    %5 = tpu.iota {dimensions = array<i32: 1>} : vector<1x128xi32>
    %c63_i32 = arith.constant 63 : i32
    %6 = vector.broadcast %c63_i32 : i32 to vector<1x128xi32>
    %7 = arith.andi %5, %6 : vector<1x128xi32>
    %8 = vector.broadcast %2 : vector<8x1xf32> to vector<8x128xf32>
    %9 = arith.mulf %0, %8 : vector<8x128xf32>
    %10 = vector.broadcast %3 : vector<8x1xf32> to vector<8x128xf32>
    %11 = arith.addf %9, %10 : vector<8x128xf32>
    %cst = arith.constant 0.000000e+00 : f32
    %12 = vector.broadcast %cst : f32 to vector<8x128xf32>
    %13 = arith.maximumf %11, %12 : vector<8x128xf32>
    %c0_3 = arith.constant 0 : index
    %c0_4 = arith.constant 0 : index
    %c0_5 = arith.constant 0 : index
    %14 = vector.load %arg1[%c0_3, %c0_4, %c0_5] : memref<2x8x24xf32, #tpu.memory_space<vmem>>, vector<1x8x24xf32>
    %15 = vector.shape_cast %14 : vector<1x8x24xf32> to vector<8x24xf32>
    %c2_i32 = arith.constant 2 : i32
    %16 = tpu.dynamic_rotate %13 by %c2_i32 dim 1 : vector<8x128xf32>, i32 -> vector<8x128xf32>
    %c-2_i32 = arith.constant -2 : i32
    %17 = vector.broadcast %c-2_i32 : i32 to vector<1x128xi32>
    %18 = arith.addi %7, %17 : vector<1x128xi32>
    %c0_i32 = arith.constant 0 : i32
    %19 = vector.broadcast %c0_i32 : i32 to vector<1x128xi32>
    %20 = arith.cmpi sge, %18, %19 : vector<1x128xi32>
    %c-2_i32_6 = arith.constant -2 : i32
    %21 = vector.broadcast %c-2_i32_6 : i32 to vector<1x128xi32>
    %22 = arith.addi %7, %21 : vector<1x128xi32>
    %c64_i32 = arith.constant 64 : i32
    %23 = vector.broadcast %c64_i32 : i32 to vector<1x128xi32>
    %24 = arith.cmpi slt, %22, %23 : vector<1x128xi32>
    %25 = arith.andi %20, %24 : vector<1x128xi1>
    %cst_7 = arith.constant 0.000000e+00 : f32
    %26 = vector.shape_cast %25 : vector<1x128xi1> to vector<1x128xi1>
    %27 = vector.broadcast %26 : vector<1x128xi1> to vector<8x128xi1>
    %28 = vector.broadcast %cst_7 : f32 to vector<8x128xf32>
    %29 = arith.select %27, %16, %28 : vector<8x128xi1>, vector<8x128xf32>
    %c126_i32 = arith.constant 126 : i32
    %30 = tpu.dynamic_rotate %13 by %c126_i32 dim 1 : vector<8x128xf32>, i32 -> vector<8x128xf32>
    %c2_i32_8 = arith.constant 2 : i32
    %31 = vector.broadcast %c2_i32_8 : i32 to vector<1x128xi32>
    %32 = arith.addi %7, %31 : vector<1x128xi32>
    %c0_i32_9 = arith.constant 0 : i32
    %33 = vector.broadcast %c0_i32_9 : i32 to vector<1x128xi32>
    %34 = arith.cmpi sge, %32, %33 : vector<1x128xi32>
    %c2_i32_10 = arith.constant 2 : i32
    %35 = vector.broadcast %c2_i32_10 : i32 to vector<1x128xi32>
    %36 = arith.addi %7, %35 : vector<1x128xi32>
    %c64_i32_11 = arith.constant 64 : i32
    %37 = vector.broadcast %c64_i32_11 : i32 to vector<1x128xi32>
    %38 = arith.cmpi slt, %36, %37 : vector<1x128xi32>
    %39 = arith.andi %34, %38 : vector<1x128xi1>
    %cst_12 = arith.constant 0.000000e+00 : f32
    %40 = vector.shape_cast %39 : vector<1x128xi1> to vector<1x128xi1>
    %41 = vector.broadcast %40 : vector<1x128xi1> to vector<8x128xi1>
    %42 = vector.broadcast %cst_12 : f32 to vector<8x128xf32>
    %43 = arith.select %41, %30, %42 : vector<8x128xi1>, vector<8x128xf32>
    %44 = tpu.concatenate %29, %13, %43 in 0 : vector<8x128xf32>, vector<8x128xf32>, vector<8x128xf32> -> vector<24x128xf32>
    %cst_13 = arith.constant dense<0.000000e+00> : vector<8x128xf32>
    %45 = tpu.matmul %15, %44, %cst_13 {dimension_numbers = #tpu.dot_dimension_numbers<[1], [0], [0], [1], [0, 0, 1, 1], [], []>} : vector<8x24xf32>, vector<24x128xf32>, vector<8x128xf32> -> vector<8x128xf32>
    %46 = vector.broadcast %4 : vector<8x1xf32> to vector<8x128xf32>
    %47 = arith.addf %45, %46 : vector<8x128xf32>
    %cst_14 = arith.constant 0.000000e+00 : f32
    %48 = vector.broadcast %cst_14 : f32 to vector<8x128xf32>
    %49 = arith.maximumf %47, %48 : vector<8x128xf32>
    %c1 = arith.constant 1 : index
    %c0_15 = arith.constant 0 : index
    %c0_16 = arith.constant 0 : index
    %50 = vector.load %arg1[%c1, %c0_15, %c0_16] : memref<2x8x24xf32, #tpu.memory_space<vmem>>, vector<1x8x24xf32>
    %51 = vector.shape_cast %50 : vector<1x8x24xf32> to vector<8x24xf32>
    %c1_i32 = arith.constant 1 : i32
    %52 = tpu.dynamic_rotate %49 by %c1_i32 dim 1 : vector<8x128xf32>, i32 -> vector<8x128xf32>
    %c-1_i32 = arith.constant -1 : i32
    %53 = vector.broadcast %c-1_i32 : i32 to vector<1x128xi32>
    %54 = arith.addi %7, %53 : vector<1x128xi32>
    %c0_i32_17 = arith.constant 0 : i32
    %55 = vector.broadcast %c0_i32_17 : i32 to vector<1x128xi32>
    %56 = arith.cmpi sge, %54, %55 : vector<1x128xi32>
    %c-1_i32_18 = arith.constant -1 : i32
    %57 = vector.broadcast %c-1_i32_18 : i32 to vector<1x128xi32>
    %58 = arith.addi %7, %57 : vector<1x128xi32>
    %c64_i32_19 = arith.constant 64 : i32
    %59 = vector.broadcast %c64_i32_19 : i32 to vector<1x128xi32>
    %60 = arith.cmpi slt, %58, %59 : vector<1x128xi32>
    %61 = arith.andi %56, %60 : vector<1x128xi1>
    %cst_20 = arith.constant 0.000000e+00 : f32
    %62 = vector.shape_cast %61 : vector<1x128xi1> to vector<1x128xi1>
    %63 = vector.broadcast %62 : vector<1x128xi1> to vector<8x128xi1>
    %64 = vector.broadcast %cst_20 : f32 to vector<8x128xf32>
    %65 = arith.select %63, %52, %64 : vector<8x128xi1>, vector<8x128xf32>
    %c127_i32 = arith.constant 127 : i32
    %66 = tpu.dynamic_rotate %49 by %c127_i32 dim 1 : vector<8x128xf32>, i32 -> vector<8x128xf32>
    %c1_i32_21 = arith.constant 1 : i32
    %67 = vector.broadcast %c1_i32_21 : i32 to vector<1x128xi32>
    %68 = arith.addi %7, %67 : vector<1x128xi32>
    %c0_i32_22 = arith.constant 0 : i32
    %69 = vector.broadcast %c0_i32_22 : i32 to vector<1x128xi32>
    %70 = arith.cmpi sge, %68, %69 : vector<1x128xi32>
    %c1_i32_23 = arith.constant 1 : i32
    %71 = vector.broadcast %c1_i32_23 : i32 to vector<1x128xi32>
    %72 = arith.addi %7, %71 : vector<1x128xi32>
    %c64_i32_24 = arith.constant 64 : i32
    %73 = vector.broadcast %c64_i32_24 : i32 to vector<1x128xi32>
    %74 = arith.cmpi slt, %72, %73 : vector<1x128xi32>
    %75 = arith.andi %70, %74 : vector<1x128xi1>
    %cst_25 = arith.constant 0.000000e+00 : f32
    %76 = vector.shape_cast %75 : vector<1x128xi1> to vector<1x128xi1>
    %77 = vector.broadcast %76 : vector<1x128xi1> to vector<8x128xi1>
    %78 = vector.broadcast %cst_25 : f32 to vector<8x128xf32>
    %79 = arith.select %77, %66, %78 : vector<8x128xi1>, vector<8x128xf32>
    %80 = tpu.concatenate %65, %49, %79 in 0 : vector<8x128xf32>, vector<8x128xf32>, vector<8x128xf32> -> vector<24x128xf32>
    %cst_26 = arith.constant dense<0.000000e+00> : vector<8x128xf32>
    %81 = tpu.matmul %51, %80, %cst_26 {dimension_numbers = #tpu.dot_dimension_numbers<[1], [0], [0], [1], [0, 0, 1, 1], [], []>} : vector<8x24xf32>, vector<24x128xf32>, vector<8x128xf32> -> vector<8x128xf32>
    %82 = arith.addf %81, %0 : vector<8x128xf32>
    %c0_27 = arith.constant 0 : index
    %c0_28 = arith.constant 0 : index
    %83 = vector.load %arg3[%c0_27, %c0_28] : memref<8x128xf32, #tpu.memory_space<vmem>>, vector<8x128xf32>
    tpu.vector_store %arg3[%c0_27, %c0_28], %82 {strides = array<i32>} : memref<8x128xf32, #tpu.memory_space<vmem>>, vector<8x128xf32>,
    return
  }
}

</mosaic_0001>

<llo_original>
// kernel: tpu_custom_call.1
$region0: #{tpu_custom_call.1}
  #allocation0 [shape = 'u32[]', space=smem, size = 0x4, offset = 0x4, fixed_abs, tag = 'smem constant byte address 0x4 - core index']
  #allocation1 [shape = 'u32[144,128]{1,0:T(1,128)}', space=vmem, size = 0x12000, scoped, tag = 'internal scratch']
  %s0 = inlined_call_operand.vmem [shape: f32[8,128], index: 0, kind: input, shape index: {}]
  %s1 = inlined_call_operand.hbm [shape: f32[2,8,24], index: 1, kind: input, shape index: {}]
  %s2 = inlined_call_operand.vmem [shape: f32[8,3], index: 2, kind: input, shape index: {}]
  %s3 = inlined_call_operand.hbm [shape: f32[8,128], index: 3, kind: output, shape index: {}]
  %s4 = sld [smem:[#allocation0]]
  $region26: #{tpu_custom_call.1} parent=0
    _
  %s6 = ssub.s32 1, %s4
  %s7 = scalar_select 0, %s6, %s4
  $region1: #{tpu_custom_call.1} parent=0
    #allocation2 [shape = 'u8[8192]{0}', space=vmem, size = 0x2000, scoped, tag = 'input window, operand 1, single buffered']
    #allocation3 [shape = 's32[1]{0}', space=sflag, size = 0x4, scoped, tag = 'scoped memory for tpu_custom_call.1']
    #allocation4 [shape = 's32[1]{0}', space=sflag, size = 0x4, scoped, tag = 'scoped memory for tpu_custom_call.1']
    #allocation5 [shape = 'u8[4096]{0}', space=vmem, size = 0x1000, scoped, tag = 'output window, operand 0, single buffered']
    %8 = vsyncpa [#allocation3], 0
    %9 = vsyncpa [#allocation4], 0
    // Predicated region
    $region2: #{tpu_custom_call.1} parent=1 // pred_check
      _
    $region3: #{tpu_custom_call.1} parent=1 // pred_check_branch
      %11 = sbr.rel (0) target = $region5
    $region4: #{tpu_custom_call.1} parent=1 // pred_region
      _
    $region5: #{tpu_custom_call.1} parent=1 // pred_fallthru
      _
    // Predicated region
    $region6: #{tpu_custom_call.1} parent=1 // pred_check
      _
    $region7: #{tpu_custom_call.1} parent=1 // pred_check_branch
      %13 = sbr.rel (0) target = $region9
    $region8: #{tpu_custom_call.1} parent=1 // pred_region
      %s15 = ssub.s32 256, 256
      %16 = vsyncadd [#allocation3], %s15
      %s17 = sshll.u32 [#allocation2], 4
      %s18 = int_to_ptr.vmem [resolvable:$true] %s17
      %23 = dma.hbm_to_vmem [thread:$0]  %s1, 256, %s18, [#allocation3], 128, 128, 8
    $region9: #{tpu_custom_call.1} parent=1 // pred_fallthru
      _
    // Predicated region
    $region10: #{tpu_custom_call.1} parent=1 // pred_check
      _
    $region11: #{tpu_custom_call.1} parent=1 // pred_check_branch
      %25 = sbr.rel (0) target = $region13
    $region12: #{tpu_custom_call.1} parent=1 // pred_region
      _
    $region13: #{tpu_custom_call.1} parent=1 // pred_fallthru
      _
    // Predicated region
    $region14: #{tpu_custom_call.1} parent=1 // pred_check
      _
    $region15: #{tpu_custom_call.1} parent=1 // pred_check_branch
      %27 = sbr.rel (0) target = $region17
    $region16: #{tpu_custom_call.1} parent=1 // pred_region
      %28 = dma.done [#allocation3], 256
    $region17: #{tpu_custom_call.1} parent=1 // pred_fallthru
      _
    %v29 = vld [vmem:[%s0] sm:$0xff]
    %v30 = vld [vmem:[%s2] sm:$0xff]
    %v31 = vlaneseq
    %v32 = vand.u32 %v31, 127
    %v33 = vand.u32 %v32, 63
    %35 = vset.pattern.permute.xlu0 0
    %36 = vperm.xlu0 %35, %v30
    %v37 = vpop.permute.xlu0 %36
    %v39 = vmul.f32 %v29, %v37
    %40 = vset.pattern.permute.xlu0 1
    %41 = vperm.xlu0 %40, %v30
    %v42 = vpop.permute.xlu0 %41
    %v44 = vadd.f32 %v39, %v42
    %v45 = vmax.f32 %v44, 0.0
    %v46 = vld [vmem:[#allocation2] sm:$0xff]
    %47 = vrot.lane.b32.xlu0 %v45, 2
    %v48 = vpop.permute.xlu0 %47
    %v49 = vadd.s32 %v33, 4294967294
    %vm50 = vcmp.ge.s32.totalorder %v49, 0
    %vm51 = vcmp.lt.s32.totalorder %v49, 64
    %vm52 = vmand %vm50, %vm51
    %v53 = vsel %vm52, 1, 0
    %vm54 = vcmp.eq.s32.totalorder %v53, 1
    %v55 = vsel %vm54, %v48, 0.0
    %56 = vrot.lane.b32.xlu0 %v45, 126
    %v57 = vpop.permute.xlu0 %56
    %v58 = vadd.s32 %v33, 2
    %vm59 = vcmp.ge.s32.totalorder %v58, 0
    %vm60 = vcmp.lt.s32.totalorder %v58, 64
    %vm61 = vmand %vm59, %vm60
    %v62 = vsel %vm61, 1, 0
    %vm63 = vcmp.eq.s32.totalorder %v62, 1
    %v64 = vsel %vm63, %v57, 0.0
    %65 = vset.pattern.permute.xlu0 2
    %66 = vperm.xlu0 %65, %v30
    %v67 = vpop.permute.xlu0 %66
    %vm69 = vcmask 195584
    %v71 = vsel %vm69, %v46, 0
    %73 = vmatprep.subr.mxu0 0.0
    %74 = vmatpush1.msra.mxu0 0.0
    %75 = vmatprep.subr.mxu0 0.0
    %76 = vmatpush1.msra.mxu0 0.0
    %77 = vmatprep.subr.mxu0 0.0
    %78 = vmatpush1.msra.mxu0 0.0
    %79 = vmatprep.subr.mxu0 0.0
    %80 = vmatpush1.msra.mxu0 0.0
    %81 = vmatprep.subr.mxu0 0.0
    %82 = vmatpush1.msra.mxu0 0.0
    %83 = vmatprep.subr.mxu0 0.0
    %84 = vmatpush1.msra.mxu0 0.0
    %85 = vmatprep.subr.mxu0 0.0
    %86 = vmatpush1.msra.mxu0 0.0
    %87 = vmatprep.subr.mxu0 0.0
    %88 = vmatpush1.msra.mxu0 0.0
    %89 = vmatprep.subr.mxu0 0.0
    %90 = vmatpush1.msra.mxu0 0.0
    %91 = vmatprep.subr.mxu0 0.0
    %92 = vmatpush1.msra.mxu0 0.0
    %93 = vmatprep.subr.mxu0 0.0
    %94 = vmatpush1.msra.mxu0 0.0
    %95 = vmatprep.subr.mxu0 0.0
    %96 = vmatpush1.msra.mxu0 0.0
    %97 = vmatprep.subr.mxu0 0.0
    %98 = vmatpush1.msra.mxu0 0.0
    %99 = vmatprep.subr.mxu0 0.0
    %100 = vmatpush1.msra.mxu0 %v64
    %101 = vmatprep.subr.mxu0 0.0
    %102 = vmatpush1.msra.mxu0 %v45
    %103 = vmatprep.subr.mxu0 0.0
    %104 = vmatpush1.msra.mxu0 %v55
    %105 = vmatprep.subr.mxu0 0.0
    %106 = vmatpush2.msra.mxu0 0.0
    %107 = vmatprep.subr.mxu0 0.0
    %108 = vmatpush2.msra.mxu0 0.0
    %109 = vmatprep.subr.mxu0 0.0
    %110 = vmatpush2.msra.mxu0 0.0
    %111 = vmatprep.subr.mxu0 0.0
    %112 = vmatpush2.msra.mxu0 0.0
    %113 = vmatprep.subr.mxu0 0.0
    %114 = vmatpush2.msra.mxu0 0.0
    %115 = vmatprep.subr.mxu0 0.0
    %116 = vmatpush2.msra.mxu0 0.0
    %117 = vmatprep.subr.mxu0 0.0
    %118 = vmatpush2.msra.mxu0 0.0
    %119 = vmatprep.subr.mxu0 0.0
    %120 = vmatpush2.msra.mxu0 0.0
    %121 = vmatprep.subr.mxu0 0.0
    %122 = vmatpush2.msra.mxu0 0.0
    %123 = vmatprep.subr.mxu0 0.0
    %124 = vmatpush2.msra.mxu0 0.0
    %125 = vmatprep.subr.mxu0 0.0
    %126 = vmatpush2.msra.mxu0 0.0
    %127 = vmatprep.subr.mxu0 0.0
    %128 = vmatpush2.msra.mxu0 0.0
    %129 = vmatprep.subr.mxu0 0.0
    %130 = vmatpush2.msra.mxu0 0.0
    %131 = vmatprep.subr.mxu0 0.0
    %132 = vmatpush2.msra.mxu0 0.0
    %133 = vmatprep.subr.mxu0 0.0
    %134 = vmatpush2.msra.mxu0 0.0
    %135 = vmatprep.subr.mxu0 0.0
    %136 = vmatpush2.msra.mxu0 0.0
    %137 = vmatprep.mubr.f32.mxu0 0.0
    %138 = vmatmul.mubr.f32.gmra.mxu0 %v71
    %v139 = vpop.f32.mrf.mxu0
    %v140 = vadd.f32 %v67, %v139
    %v141 = vpop.f32.mrf.mxu0
    %142 = vdwg.mxu0
    %v143 = vmax.f32 %v140, 0.0
    %s144 = scalar_lea.vmem [#allocation2], 8
    %v145 = vld [vmem:[%s144] sm:$0xff]
    %146 = vrot.lane.b32.xlu0 %v143, 1
    %v147 = vpop.permute.xlu0 %146
    %v148 = vadd.s32 %v33, 4294967295
    %vm149 = vcmp.ge.s32.totalorder %v148, 0
    %vm150 = vcmp.lt.s32.totalorder %v148, 64
    %vm151 = vmand %vm149, %vm150
    %v152 = vsel %vm151, 1, 0
    %vm153 = vcmp.eq.s32.totalorder %v152, 1
    %v154 = vsel %vm153, %v147, 0.0
    %155 = vrot.lane.b32.xlu0 %v143, 127
    %v156 = vpop.permute.xlu0 %155
    %v157 = vadd.s32 %v33, 1
    %vm158 = vcmp.ge.s32.totalorder %v157, 0
    %vm159 = vcmp.lt.s32.totalorder %v157, 64
    %vm160 = vmand %vm158, %vm159
    %v161 = vsel %vm160, 1, 0
    %vm162 = vcmp.eq.s32.totalorder %v161, 1
    %v163 = vsel %vm162, %v156, 0.0
    %v165 = vsel %vm69, %v145, 0
    %167 = vmatprep.subr.mxu0 0.0
    %168 = vmatpush1.msra.mxu0 0.0
    %169 = vmatprep.subr.mxu0 0.0
    %170 = vmatpush1.msra.mxu0 0.0
    %171 = vmatprep.subr.mxu0 0.0
    %172 = vmatpush1.msra.mxu0 0.0
    %173 = vmatprep.subr.mxu0 0.0
    %174 = vmatpush1.msra.mxu0 0.0
    %175 = vmatprep.subr.mxu0 0.0
    %176 = vmatpush1.msra.mxu0 0.0
    %177 = vmatprep.subr.mxu0 0.0
    %178 = vmatpush1.msra.mxu0 0.0
    %179 = vmatprep.subr.mxu0 0.0
    %180 = vmatpush1.msra.mxu0 0.0
    %181 = vmatprep.subr.mxu0 0.0
    %182 = vmatpush1.msra.mxu0 0.0
    %183 = vmatprep.subr.mxu0 0.0
    %184 = vmatpush1.msra.mxu0 0.0
    %185 = vmatprep.subr.mxu0 0.0
    %186 = vmatpush1.msra.mxu0 0.0
    %187 = vmatprep.subr.mxu0 0.0
    %188 = vmatpush1.msra.mxu0 0.0
    %189 = vmatprep.subr.mxu0 0.0
    %190 = vmatpush1.msra.mxu0 0.0
    %191 = vmatprep.subr.mxu0 0.0
    %192 = vmatpush1.msra.mxu0 0.0
    %193 = vmatprep.subr.mxu0 0.0
    %194 = vmatpush1.msra.mxu0 %v163
    %195 = vmatprep.subr.mxu0 0.0
    %196 = vmatpush1.msra.mxu0 %v143
    %197 = vmatprep.subr.mxu0 0.0
    %198 = vmatpush1.msra.mxu0 %v154
    %199 = vmatprep.subr.mxu0 0.0
    %200 = vmatpush2.msra.mxu0 0.0
    %201 = vmatprep.subr.mxu0 0.0
    %202 = vmatpush2.msra.mxu0 0.0
    %203 = vmatprep.subr.mxu0 0.0
    %204 = vmatpush2.msra.mxu0 0.0
    %205 = vmatprep.subr.mxu0 0.0
    %206 = vmatpush2.msra.mxu0 0.0
    %207 = vmatprep.subr.mxu0 0.0
    %208 = vmatpush2.msra.mxu0 0.0
    %209 = vmatprep.subr.mxu0 0.0
    %210 = vmatpush2.msra.mxu0 0.0
    %211 = vmatprep.subr.mxu0 0.0
    %212 = vmatpush2.msra.mxu0 0.0
    %213 = vmatprep.subr.mxu0 0.0
    %214 = vmatpush2.msra.mxu0 0.0
    %215 = vmatprep.subr.mxu0 0.0
    %216 = vmatpush2.msra.mxu0 0.0
    %217 = vmatprep.subr.mxu0 0.0
    %218 = vmatpush2.msra.mxu0 0.0
    %219 = vmatprep.subr.mxu0 0.0
    %220 = vmatpush2.msra.mxu0 0.0
    %221 = vmatprep.subr.mxu0 0.0
    %222 = vmatpush2.msra.mxu0 0.0
    %223 = vmatprep.subr.mxu0 0.0
    %224 = vmatpush2.msra.mxu0 0.0
    %225 = vmatprep.subr.mxu0 0.0
    %226 = vmatpush2.msra.mxu0 0.0
    %227 = vmatprep.subr.mxu0 0.0
    %228 = vmatpush2.msra.mxu0 0.0
    %229 = vmatprep.subr.mxu0 0.0
    %230 = vmatpush2.msra.mxu0 0.0
    %231 = vmatprep.mubr.f32.mxu0 0.0
    %232 = vmatmul.mubr.f32.gmra.mxu0 %v165
    %v233 = vpop.f32.mrf.mxu0
    %v234 = vadd.f32 %v29, %v233
    %v235 = vpop.f32.mrf.mxu0
    %236 = vdwg.mxu0
    %237 = vst [vmem:[#allocation5] sm:$0xff] %v234
    // Predicated region
    $region18: #{tpu_custom_call.1} parent=1 // pred_check
      _
    $region19: #{tpu_custom_call.1} parent=1 // pred_check_branch
      %239 = sbr.rel (0) target = $region21
    $region20: #{tpu_custom_call.1} parent=1 // pred_region
      %s241 = ssub.s32 128, 128
      %242 = vsyncadd [#allocation4], %s241
      %s244 = sshll.u32 [#allocation5], 4
      %s245 = int_to_ptr.vmem [resolvable:$true] %s244
      %247 = dma.vmem_to_hbm [thread:$0]  %s245, 128, %s3, [#allocation4]
    $region21: #{tpu_custom_call.1} parent=1 // pred_fallthru
      _
    // Predicated region
    $region22: #{tpu_custom_call.1} parent=1 // pred_check
      _
    $region23: #{tpu_custom_call.1} parent=1 // pred_check_branch
      %249 = sbr.rel (0) target = $region25
    $region24: #{tpu_custom_call.1} parent=1 // pred_region
      %250 = dma.done [#allocation4], 128
    $region25: #{tpu_custom_call.1} parent=1 // pred_fallthru
      _
    %251 = vsyncpa [#allocation3], 1
    %252 = vsyncpa [#allocation4], 1

</llo_original>
